<compile_context>
chip_gen: v5e
topology: v5e:2x2
jax: 0.10.0
libtpu: 0.0.40
codegen_flags: <defaults>
</compile_context>

<pallas_src>
import jax
import jax.numpy as jnp
from jax.experimental import pallas as pl
from jax.experimental.pallas import tpu as pltpu


def decoder_mlp_kernel(z_ref, w1_ref, w23_ref, b_ref, out_ref):
    """Fused 3-layer MLP (Linear-Tanh-Linear-Tanh-Linear), one batch tile."""
    z = z_ref[...]                                    # [TB, latent]

    b1 = b_ref[0:1, :]                                # [1, PW]
    b2 = b_ref[1:2, :]
    b3 = b_ref[2:3, :]

    # layer 1: Linear + Tanh  (tanh lands on the EUP slot, bias add on VPU)
    h = jnp.dot(z, w1_ref[...], preferred_element_type=jnp.float32)
    h = jnp.tanh(h + b1)

    # layer 2: Linear + Tanh
    h = jnp.dot(h, w23_ref[0], preferred_element_type=jnp.float32)
    h = jnp.tanh(h + b2)

    # layer 3: Linear (no activation); output dim is lane-padded to PW
    y = jnp.dot(h, w23_ref[1], preferred_element_type=jnp.float32)
    out_ref[...] = (y + b3).astype(out_ref.dtype)


def _cdiv(a, b):
    return -(-a // b)


def _round_up(x, m):
    return _cdiv(x, m) * m


def _pack_params(params, latent_dim, hidden_dim, out_dim, pw):
    """Zero-pad hidden/output dims to a common lane width PW and pack:
         w1p : (latent, PW)      w23 : (2, PW, PW)      bpk : (3, PW)
    Exact: tanh(0)=0 and zero rows/cols contribute nothing."""
    w1, b1, w2, b2, w3, b3 = params
    w1p = jnp.pad(w1, ((0, 0), (0, pw - hidden_dim)))
    w2p = jnp.pad(w2, ((0, pw - hidden_dim), (0, pw - hidden_dim)))
    w3p = jnp.pad(w3, ((0, pw - hidden_dim), (0, pw - out_dim)))
    w23 = jnp.stack([w2p, w3p])                       # (2, PW, PW)
    bpk = jnp.stack([
        jnp.pad(b1.reshape(-1), (0, pw - hidden_dim)),
        jnp.pad(b2.reshape(-1), (0, pw - hidden_dim)),
        jnp.pad(b3.reshape(-1), (0, pw - out_dim)),
    ])                                                # (3, PW)
    return w1p, w23, bpk


def decoder_forward(z, params, *, max_batch_tile=4096, min_grid_steps=1):
    """Calls the fused Pallas kernel. z: [B, latent_dim] float32.

    max_batch_tile : upper bound on rows per grid step (kernel is DMA / per-step
                     overhead bound, so bigger is better; ~8.7 MiB VMEM even at
                     8192 rows, safe on every generation).
    min_grid_steps : set to 2 on v7x with large batches so both TensorCores get
                     work via dimension_semantics=("parallel",).
    """
    w1, _, _, _, w3, _ = params
    B, latent_dim = z.shape
    hidden_dim = w1.shape[1]
    out_dim = w3.shape[1]

    # common lane-dense width for hidden activations and output
    pw = _round_up(max(hidden_dim, out_dim, 128), 128)
    w1p, w23, bpk = _pack_params(params, latent_dim, hidden_dim, out_dim, pw)

    # --- batch tiling: balanced, sublane-aligned tiles -----------------------
    steps = max(_cdiv(B, max_batch_tile), 1)
    if min_grid_steps > 1:
        # only force extra steps if there are enough rows to split sensibly
        steps = max(steps, min(min_grid_steps, max(B // 8, 1)))
    TB = _round_up(_cdiv(B, steps), 8)
    Bp = steps * TB
    zp = jnp.pad(z, ((0, Bp - B), (0, 0))) if Bp != B else z

    # z / out blocked along batch; packed weights & biases fully resident
    # (constant index_map => DMA'd once, no re-fetch across grid steps).
    out = pl.pallas_call(
        decoder_mlp_kernel,
        out_shape=jax.ShapeDtypeStruct((Bp, pw), jnp.float32),
        grid=(steps,),
        in_specs=[
            pl.BlockSpec((TB, latent_dim), lambda i: (i, 0)),      # z
            pl.BlockSpec((latent_dim, pw), lambda i: (0, 0)),      # w1
            pl.BlockSpec((2, pw, pw), lambda i: (0, 0, 0)),        # w2 | w3
            pl.BlockSpec((3, pw), lambda i: (0, 0)),               # b1|b2|b3
        ],
        out_specs=pl.BlockSpec((TB, pw), lambda i: (i, 0)),
        compiler_params=pltpu.CompilerParams(
            dimension_semantics=("parallel",),   # shard batch across TCs (v7x)
            vmem_limit_bytes=32 * 1024 * 1024,   # safe under v7x's 64 MiB VMEM
        ),
    )(zp, w1p, w23, bpk)

    # slice back to the logical batch / output dims (consumers that want to
    # avoid this extra pass on v5e/v6e can keep the padded array instead)
    return out[:B, :out_dim]


def init_decoder_params(key, latent_dim, hidden_dim, output_dim):
    """Deterministic init mimicking PyTorch's default U(-1/sqrt(fan_in), +)."""
    def linear(key, fan_in, fan_out):
        kw, kb = jax.random.split(key)
        bound = 1.0 / jnp.sqrt(fan_in)
        # stored as [in, out] so the kernel does x @ W
        w = jax.random.uniform(kw, (fan_in, fan_out), jnp.float32, -bound, bound)
        b = jax.random.uniform(kb, (fan_out,), jnp.float32, -bound, bound)
        return w, b

    k1, k2, k3 = jax.random.split(key, 3)
    w1, b1 = linear(k1, latent_dim, hidden_dim)
    w2, b2 = linear(k2, hidden_dim, hidden_dim)
    w3, b3 = linear(k3, hidden_dim, output_dim)
    return (w1, b1, w2, b2, w3, b3)


def decoder_reference(z, params):
    """Pure-JAX reference of the PyTorch forward."""
    w1, b1, w2, b2, w3, b3 = params
    h = jnp.tanh(z @ w1 + b1)
    h = jnp.tanh(h @ w2 + b2)
    return h @ w3 + b3


if __name__ == "__main__":
    # Small shapes consistent with the module's __init__:
    latent_dim = 8
    hidden_dim = 32
    num_continuous = 4
    num_categories = [3, 2]
    output_dim = num_continuous + sum(num_categories)   # = 9
    batch = 8

    key = jax.random.PRNGKey(0)
    kz, kp, kz2 = jax.random.split(key, 3)

    z = jax.random.normal(kz, (batch, latent_dim), dtype=jnp.float32)
    params = init_decoder_params(kp, latent_dim, hidden_dim, output_dim)

    # 1) tiny demo batch (single grid step)
    out = decoder_forward(z, params)
    out = jax.block_until_ready(out)
    ref = decoder_reference(z, params)
    assert out.shape == (batch, output_dim), out.shape
    assert jnp.allclose(out, ref, atol=1e-5, rtol=1e-5), (
        float(jnp.max(jnp.abs(out - ref))))

    # 2) multi-step grid exercising balanced tiling + padded batch slicing
    batch2 = 300
    z2 = jax.random.normal(kz2, (batch2, latent_dim), dtype=jnp.float32)
    out2 = decoder_forward(z2, params, max_batch_tile=128, min_grid_steps=2)
    out2 = jax.block_until_ready(out2)
    ref2 = decoder_reference(z2, params)
    assert out2.shape == (batch2, output_dim), out2.shape
    assert jnp.allclose(out2, ref2, atol=1e-5, rtol=1e-5), (
        float(jnp.max(jnp.abs(out2 - ref2))))

    print("KERNEL_OK")
</pallas_src>

<mosaic_0001>
module attributes {stable_mosaic.version = 11 : i64} {
  func.func @decoder_mlp_kernel(%arg0: i32, %arg1: memref<8x8xf32, #tpu.memory_space<vmem>>, %arg2: memref<8x128xf32, #tpu.memory_space<vmem>>, %arg3: memref<2x128x128xf32, #tpu.memory_space<vmem>>, %arg4: memref<3x128xf32, #tpu.memory_space<vmem>>, %arg5: memref<8x128xf32, #tpu.memory_space<vmem>>) attributes {dimension_semantics = [#tpu.dimension_semantics<parallel>], iteration_bounds = array<i64: 1>, scalar_prefetch = 0 : i64, scratch_operands = 0 : i64, tpu.core_type = #tpu.core_type<tc>, window_params = [{transform_indices = @transform_0, window_bounds = array<i64: 8, 8>}, {pipeline_mode = #tpu.pipeline_mode<synchronous>, transform_indices = @transform_1, window_bounds = array<i64: 8, 128>}, {pipeline_mode = #tpu.pipeline_mode<synchronous>, transform_indices = @transform_2, window_bounds = array<i64: 2, 128, 128>}, {pipeline_mode = #tpu.pipeline_mode<synchronous>, transform_indices = @transform_3, window_bounds = array<i64: 3, 128>}, {transform_indices = @transform_4, window_bounds = array<i64: 8, 128>}]} {
    %c0 = arith.constant 0 : index
    %c0_0 = arith.constant 0 : index
    %0 = vector.load %arg1[%c0, %c0_0] : memref<8x8xf32, #tpu.memory_space<vmem>>, vector<8x8xf32>
    %c0_1 = arith.constant 0 : index
    %c0_2 = arith.constant 0 : index
    %1 = vector.load %arg4[%c0_1, %c0_2] : memref<3x128xf32, #tpu.memory_space<vmem>>, vector<1x128xf32>
    %c1 = arith.constant 1 : index
    %c0_3 = arith.constant 0 : index
    %2 = vector.load %arg4[%c1, %c0_3] : memref<3x128xf32, #tpu.memory_space<vmem>>, vector<1x128xf32>
    %c2 = arith.constant 2 : index
    %c0_4 = arith.constant 0 : index
    %3 = vector.load %arg4[%c2, %c0_4] : memref<3x128xf32, #tpu.memory_space<vmem>>, vector<1x128xf32>
    %c0_5 = arith.constant 0 : index
    %c0_6 = arith.constant 0 : index
    %4 = vector.load %arg2[%c0_5, %c0_6] : memref<8x128xf32, #tpu.memory_space<vmem>>, vector<8x128xf32>
    %cst = arith.constant dense<0.000000e+00> : vector<8x128xf32>
    %5 = tpu.matmul %0, %4, %cst {dimension_numbers = #tpu.dot_dimension_numbers<[1], [0], [0], [1], [0, 0, 1, 1], [], []>} : vector<8x8xf32>, vector<8x128xf32>, vector<8x128xf32> -> vector<8x128xf32>
    %6 = vector.broadcast %1 : vector<1x128xf32> to vector<8x128xf32>
    %7 = arith.addf %5, %6 : vector<8x128xf32>
    %8 = math.tanh %7 : vector<8x128xf32>
    %c0_7 = arith.constant 0 : index
    %c0_8 = arith.constant 0 : index
    %c0_9 = arith.constant 0 : index
    %9 = vector.load %arg3[%c0_7, %c0_8, %c0_9] : memref<2x128x128xf32, #tpu.memory_space<vmem>>, vector<1x128x128xf32>
    %10 = vector.shape_cast %9 : vector<1x128x128xf32> to vector<128x128xf32>
    %cst_10 = arith.constant dense<0.000000e+00> : vector<8x128xf32>
    %11 = tpu.matmul %8, %10, %cst_10 {dimension_numbers = #tpu.dot_dimension_numbers<[1], [0], [0], [1], [0, 0, 1, 1], [], []>} : vector<8x128xf32>, vector<128x128xf32>, vector<8x128xf32> -> vector<8x128xf32>
    %12 = vector.broadcast %2 : vector<1x128xf32> to vector<8x128xf32>
    %13 = arith.addf %11, %12 : vector<8x128xf32>
    %14 = math.tanh %13 : vector<8x128xf32>
    %c1_11 = arith.constant 1 : index
    %c0_12 = arith.constant 0 : index
    %c0_13 = arith.constant 0 : index
    %15 = vector.load %arg3[%c1_11, %c0_12, %c0_13] : memref<2x128x128xf32, #tpu.memory_space<vmem>>, vector<1x128x128xf32>
    %16 = vector.shape_cast %15 : vector<1x128x128xf32> to vector<128x128xf32>
    %cst_14 = arith.constant dense<0.000000e+00> : vector<8x128xf32>
    %17 = tpu.matmul %14, %16, %cst_14 {dimension_numbers = #tpu.dot_dimension_numbers<[1], [0], [0], [1], [0, 0, 1, 1], [], []>} : vector<8x128xf32>, vector<128x128xf32>, vector<8x128xf32> -> vector<8x128xf32>
    %18 = vector.broadcast %3 : vector<1x128xf32> to vector<8x128xf32>
    %19 = arith.addf %17, %18 : vector<8x128xf32>
    %c0_15 = arith.constant 0 : index
    %c0_16 = arith.constant 0 : index
    %20 = vector.load %arg5[%c0_15, %c0_16] : memref<8x128xf32, #tpu.memory_space<vmem>>, vector<8x128xf32>
    tpu.vector_store %arg5[%c0_15, %c0_16], %19 {strides = array<i32>} : memref<8x128xf32, #tpu.memory_space<vmem>>, vector<8x128xf32>,
    return
  }
  func.func @transform_0(%arg0: i32) -> (i32, i32) {
    %c0_i32 = arith.constant 0 : i32
    %c0_i32_0 = arith.constant 0 : i32
    return %arg0, %c0_i32 : i32, i32
  }
  func.func @transform_1(%arg0: i32) -> (i32, i32) {
    %c0_i32 = arith.constant 0 : i32
    %c0_i32_0 = arith.constant 0 : i32
    %c0_i32_1 = arith.constant 0 : i32
    return %c0_i32, %c0_i32_0 : i32, i32
  }
  func.func @transform_2(%arg0: i32) -> (i32, i32, i32) {
    %c0_i32 = arith.constant 0 : i32
    %c0_i32_0 = arith.constant 0 : i32
    %c0_i32_1 = arith.constant 0 : i32
    %c0_i32_2 = arith.constant 0 : i32
    return %c0_i32, %c0_i32_0, %c0_i32_1 : i32, i32, i32
  }
  func.func @transform_3(%arg0: i32) -> (i32, i32) {
    %c0_i32 = arith.constant 0 : i32
    %c0_i32_0 = arith.constant 0 : i32
    %c0_i32_1 = arith.constant 0 : i32
    return %c0_i32, %c0_i32_0 : i32, i32
  }
  func.func @transform_4(%arg0: i32) -> (i32, i32) {
    %c0_i32 = arith.constant 0 : i32
    %c0_i32_0 = arith.constant 0 : i32
    return %arg0, %c0_i32 : i32, i32
  }
}

</mosaic_0001>

<llo_original>
// kernel: tpu_custom_call.1
$region0: #{tpu_custom_call.1}
  #allocation0 [shape = 'u32[]', space=smem, size = 0x4, offset = 0x4, fixed_abs, tag = 'smem constant byte address 0x4 - core index']
  #allocation1 [shape = 'u32[72,128]{1,0:T(1,128)}', space=vmem, size = 0x9000, scoped, tag = 'internal scratch']
  %s0 = inlined_call_operand.hbm [shape: f32[8,8], index: 0, kind: input, shape index: {}]
  %s1 = inlined_call_operand.hbm [shape: f32[8,128], index: 1, kind: input, shape index: {}]
  %s2 = inlined_call_operand.hbm [shape: f32[2,128,128], index: 2, kind: input, shape index: {}]
  %s3 = inlined_call_operand.hbm [shape: f32[3,128], index: 3, kind: input, shape index: {}]
  %s4 = inlined_call_operand.hbm [shape: f32[8,128], index: 4, kind: output, shape index: {}]
  %s5 = sld [smem:[#allocation0]]
  $region42: #{tpu_custom_call.1} parent=0
    _
  %s7 = ssub.s32 1, %s5
  %s8 = scalar_select 0, %s7, %s5
  $region1: #{tpu_custom_call.1} parent=0
    #allocation2 [shape = 'u8[4096]{0}', space=vmem, size = 0x1000, scoped, tag = 'input window, operand 0, single buffered']
    #allocation3 [shape = 's32[1]{0}', space=sflag, size = 0x4, scoped, tag = 'scoped memory for tpu_custom_call.1']
    #allocation4 [shape = 's32[1]{0}', space=sflag, size = 0x4, scoped, tag = 'scoped memory for tpu_custom_call.1']
    #allocation5 [shape = 'u8[4096]{0}', space=vmem, size = 0x1000, scoped, tag = 'input window, operand 1, single buffered']
    #allocation6 [shape = 's32[1]{0}', space=sflag, size = 0x4, scoped, tag = 'scoped memory for tpu_custom_call.1']
    #allocation7 [shape = 'u8[131072]{0}', space=vmem, size = 0x20000, scoped, tag = 'input window, operand 2, single buffered']
    #allocation8 [shape = 'u8[2048]{0}', space=vmem, size = 0x800, scoped, tag = 'input window, operand 3, single buffered']
    #allocation9 [shape = 's32[1]{0}', space=sflag, size = 0x4, scoped, tag = 'scoped memory for tpu_custom_call.1']
    #allocation10 [shape = 'u8[4096]{0}', space=vmem, size = 0x1000, scoped, tag = 'output window, operand 0, single buffered']
    %9 = vsyncpa [#allocation3], 0
    %10 = vsyncpa [#allocation6], 0
    %11 = vsyncpa [#allocation9], 0
    %12 = vsyncpa [#allocation4], 0
    // Predicated region
    $region2: #{tpu_custom_call.1} parent=1 // pred_check
      _
    $region3: #{tpu_custom_call.1} parent=1 // pred_check_branch
      %14 = sbr.rel (0) target = $region5
    $region4: #{tpu_custom_call.1} parent=1 // pred_region
      %16 = vsyncadd [#allocation3], 0
      %s18 = sshll.u32 %s0, 4
      %s19 = int_to_ptr.hbm [resolvable:$true] %s18
      %s20 = sshll.u32 [#allocation2], 4
      %s21 = int_to_ptr.vmem [resolvable:$true] %s20
      %23 = dma.hbm_to_vmem [thread:$0]  %s19, 128, %s21, [#allocation3]
    $region5: #{tpu_custom_call.1} parent=1 // pred_fallthru
      _
    // Predicated region
    $region6: #{tpu_custom_call.1} parent=1 // pred_check
      _
    $region7: #{tpu_custom_call.1} parent=1 // pred_check_branch
      %25 = sbr.rel (0) target = $region9
    $region8: #{tpu_custom_call.1} parent=1 // pred_region
      %27 = vsyncadd [#allocation6], 0
      %s29 = sshll.u32 %s1, 4
      %s30 = int_to_ptr.hbm [resolvable:$true] %s29
      %s31 = sshll.u32 [#allocation5], 4
      %s32 = int_to_ptr.vmem [resolvable:$true] %s31
      %34 = dma.hbm_to_vmem [thread:$0]  %s30, 128, %s32, [#allocation6]
    $region9: #{tpu_custom_call.1} parent=1 // pred_fallthru
      _
    // Predicated region
    $region10: #{tpu_custom_call.1} parent=1 // pred_check
      _
    $region11: #{tpu_custom_call.1} parent=1 // pred_check_branch
      %36 = sbr.rel (0) target = $region13
    $region12: #{tpu_custom_call.1} parent=1 // pred_region
      %38 = vsyncadd [#allocation6], 0
      %s39 = sshll.u32 %s2, 4
      %s40 = int_to_ptr.hbm [resolvable:$true] %s39
      %s41 = sshll.u32 [#allocation7], 4
      %s42 = int_to_ptr.vmem [resolvable:$true] %s41
      %47 = dma.hbm_to_vmem [thread:$0]  %s40, 4096, %s42, [#allocation6], 128, 128, 8
    $region13: #{tpu_custom_call.1} parent=1 // pred_fallthru
      _
    // Predicated region
    $region14: #{tpu_custom_call.1} parent=1 // pred_check
      _
    $region15: #{tpu_custom_call.1} parent=1 // pred_check_branch
      %49 = sbr.rel (0) target = $region17
    $region16: #{tpu_custom_call.1} parent=1 // pred_region
      %51 = vsyncadd [#allocation9], 0
      %s53 = sshll.u32 %s3, 4
      %s54 = int_to_ptr.hbm [resolvable:$true] %s53
      %s55 = sshll.u32 [#allocation8], 4
      %s56 = int_to_ptr.vmem [resolvable:$true] %s55
      %58 = dma.hbm_to_vmem [thread:$0]  %s54, 64, %s56, [#allocation9]
    $region17: #{tpu_custom_call.1} parent=1 // pred_fallthru
      _
    // Predicated region
    $region18: #{tpu_custom_call.1} parent=1 // pred_check
      _
    $region19: #{tpu_custom_call.1} parent=1 // pred_check_branch
      %60 = sbr.rel (0) target = $region21
    $region20: #{tpu_custom_call.1} parent=1 // pred_region
      %62 = dma.done [#allocation3], 128
    $region21: #{tpu_custom_call.1} parent=1 // pred_fallthru
      _
    // Predicated region
    $region22: #{tpu_custom_call.1} parent=1 // pred_check
      _
    $region23: #{tpu_custom_call.1} parent=1 // pred_check_branch
      %64 = sbr.rel (0) target = $region25
    $region24: #{tpu_custom_call.1} parent=1 // pred_region
      %66 = dma.done [#allocation6], 128
    $region25: #{tpu_custom_call.1} parent=1 // pred_fallthru
      _
    // Predicated region
    $region26: #{tpu_custom_call.1} parent=1 // pred_check
      _
    $region27: #{tpu_custom_call.1} parent=1 // pred_check_branch
      %68 = sbr.rel (0) target = $region29
    $region28: #{tpu_custom_call.1} parent=1 // pred_region
      %70 = dma.done [#allocation6], 4096
    $region29: #{tpu_custom_call.1} parent=1 // pred_fallthru
      _
    // Predicated region
    $region30: #{tpu_custom_call.1} parent=1 // pred_check
      _
    $region31: #{tpu_custom_call.1} parent=1 // pred_check_branch
      %72 = sbr.rel (0) target = $region33
    $region32: #{tpu_custom_call.1} parent=1 // pred_region
      %74 = dma.done [#allocation9], 64
    $region33: #{tpu_custom_call.1} parent=1 // pred_fallthru
      _
    %v75 = vld [vmem:[#allocation2] sm:$0xff]
    %v76 = vld [vmem:[#allocation8] sm:$0x1]
    %v77 = vld [vmem:[#allocation8 + $0x1] sm:$0x1]
    %v78 = vld [vmem:[#allocation8 + $0x2] sm:$0x1]
    %v79 = vld [vmem:[#allocation5] sm:$0xff]
    %v80 = vperm.slane %v76, 0
    %vm81 = vcmask 64512
    %v83 = vsel %vm81, %v75, 0
    %85 = vmatpush.msra.mxu0 0.0
    %86 = vmatpush.msra.mxu0 0.0
    %87 = vmatpush.msra.mxu0 0.0
    %88 = vmatpush.msra.mxu0 0.0
    %89 = vmatpush.msra.mxu0 0.0
    %90 = vmatpush.msra.mxu0 0.0
    %91 = vmatpush.msra.mxu0 0.0
    %92 = vmatpush.msra.mxu0 0.0
    %93 = vmatpush.msra.mxu0 0.0
    %94 = vmatpush.msra.mxu0 0.0
    %95 = vmatpush.msra.mxu0 0.0
    %96 = vmatpush.msra.mxu0 0.0
    %97 = vmatpush.msra.mxu0 0.0
    %98 = vmatpush.msra.mxu0 0.0
    %99 = vmatpush.msra.mxu0 0.0
    %100 = vmatpush.msra.mxu0 %v79
    %101 = vmatmul.f32.gmra.mxu0 %v83
    %v102 = vpop.f32.mrf.mxu0
    %v103 = vadd.f32 %v80, %v102
    %104 = vdwg.mxu0
    %v105 = vtanh.pop %v103
    %v106 = vld [vmem:[#allocation7] sm:$0xff]
    %v107 = vld [vmem:[#allocation7 + $0x8] sm:$0xff]
    %v108 = vld [vmem:[#allocation7 + $0x10] sm:$0xff]
    %v109 = vld [vmem:[#allocation7 + $0x18] sm:$0xff]
    %v110 = vld [vmem:[#allocation7 + $0x20] sm:$0xff]
    %v111 = vld [vmem:[#allocation7 + $0x28] sm:$0xff]
    %v112 = vld [vmem:[#allocation7 + $0x30] sm:$0xff]
    %v113 = vld [vmem:[#allocation7 + $0x38] sm:$0xff]
    %v114 = vld [vmem:[#allocation7 + $0x40] sm:$0xff]
    %v115 = vld [vmem:[#allocation7 + $0x48] sm:$0xff]
    %v116 = vld [vmem:[#allocation7 + $0x50] sm:$0xff]
    %v117 = vld [vmem:[#allocation7 + $0x58] sm:$0xff]
    %v118 = vld [vmem:[#allocation7 + $0x60] sm:$0xff]
    %v119 = vld [vmem:[#allocation7 + $0x68] sm:$0xff]
    %v120 = vld [vmem:[#allocation7 + $0x70] sm:$0xff]
    %v121 = vld [vmem:[#allocation7 + $0x78] sm:$0xff]
    %v122 = vperm.slane %v77, 0
    %123 = vmatpush.msra.mxu0 %v121
    %124 = vmatpush.msra.mxu0 %v120
    %125 = vmatpush.msra.mxu0 %v119
    %126 = vmatpush.msra.mxu0 %v118
    %127 = vmatpush.msra.mxu0 %v117
    %128 = vmatpush.msra.mxu0 %v116
    %129 = vmatpush.msra.mxu0 %v115
    %130 = vmatpush.msra.mxu0 %v114
    %131 = vmatpush.msra.mxu0 %v113
    %132 = vmatpush.msra.mxu0 %v112
    %133 = vmatpush.msra.mxu0 %v111
    %134 = vmatpush.msra.mxu0 %v110
    %135 = vmatpush.msra.mxu0 %v109
    %136 = vmatpush.msra.mxu0 %v108
    %137 = vmatpush.msra.mxu0 %v107
    %138 = vmatpush.msra.mxu0 %v106
    %139 = vmatmul.f32.gmra.mxu0 %v105
    %v140 = vpop.f32.mrf.mxu0
    %v141 = vadd.f32 %v122, %v140
    %142 = vdwg.mxu0
    %v143 = vtanh.pop %v141
    %s144 = scalar_lea.vmem [#allocation7], 128
    %v145 = vld [vmem:[%s144] sm:$0xff]
    %v146 = vld [vmem:[%s144 + $0x8] sm:$0xff]
    %v147 = vld [vmem:[%s144 + $0x10] sm:$0xff]
    %v148 = vld [vmem:[%s144 + $0x18] sm:$0xff]
    %v149 = vld [vmem:[%s144 + $0x20] sm:$0xff]
    %v150 = vld [vmem:[%s144 + $0x28] sm:$0xff]
    %v151 = vld [vmem:[%s144 + $0x30] sm:$0xff]
    %v152 = vld [vmem:[%s144 + $0x38] sm:$0xff]
    %v153 = vld [vmem:[%s144 + $0x40] sm:$0xff]
    %v154 = vld [vmem:[%s144 + $0x48] sm:$0xff]
    %v155 = vld [vmem:[%s144 + $0x50] sm:$0xff]
    %v156 = vld [vmem:[%s144 + $0x58] sm:$0xff]
    %v157 = vld [vmem:[%s144 + $0x60] sm:$0xff]
    %v158 = vld [vmem:[%s144 + $0x68] sm:$0xff]
    %v159 = vld [vmem:[%s144 + $0x70] sm:$0xff]
    %v160 = vld [vmem:[%s144 + $0x78] sm:$0xff]
    %v161 = vperm.slane %v78, 0
    %162 = vmatpush.msra.mxu0 %v160
    %163 = vmatpush.msra.mxu0 %v159
    %164 = vmatpush.msra.mxu0 %v158
    %165 = vmatpush.msra.mxu0 %v157
    %166 = vmatpush.msra.mxu0 %v156
    %167 = vmatpush.msra.mxu0 %v155
    %168 = vmatpush.msra.mxu0 %v154
    %169 = vmatpush.msra.mxu0 %v153
    %170 = vmatpush.msra.mxu0 %v152
    %171 = vmatpush.msra.mxu0 %v151
    %172 = vmatpush.msra.mxu0 %v150
    %173 = vmatpush.msra.mxu0 %v149
    %174 = vmatpush.msra.mxu0 %v148
    %175 = vmatpush.msra.mxu0 %v147
    %176 = vmatpush.msra.mxu0 %v146
    %177 = vmatpush.msra.mxu0 %v145
    %178 = vmatmul.f32.gmra.mxu0 %v143
    %v179 = vpop.f32.mrf.mxu0
    %v180 = vadd.f32 %v161, %v179
    %181 = vdwg.mxu0
    %182 = vst [vmem:[#allocation10] sm:$0xff] %v180
    // Predicated region
    $region34: #{tpu_custom_call.1} parent=1 // pred_check
      _
    $region35: #{tpu_custom_call.1} parent=1 // pred_check_branch
      %184 = sbr.rel (0) target = $region37
    $region36: #{tpu_custom_call.1} parent=1 // pred_region
      %186 = vsyncadd [#allocation4], 0
      %s188 = sshll.u32 [#allocation10], 4
      %s189 = int_to_ptr.vmem [resolvable:$true] %s188
      %s190 = sshll.u32 %s4, 4
      %s191 = int_to_ptr.hbm [resolvable:$true] %s190
      %193 = dma.vmem_to_hbm [thread:$0]  %s189, 128, %s191, [#allocation4]
    $region37: #{tpu_custom_call.1} parent=1 // pred_fallthru
      _
    // Predicated region
    $region38: #{tpu_custom_call.1} parent=1 // pred_check
      _
    $region39: #{tpu_custom_call.1} parent=1 // pred_check_branch
      %195 = sbr.rel (0) target = $region41
    $region40: #{tpu_custom_call.1} parent=1 // pred_region
      %197 = dma.done [#allocation4], 128
    $region41: #{tpu_custom_call.1} parent=1 // pred_fallthru
      _
    %198 = vsyncpa [#allocation3], 1
    %199 = vsyncpa [#allocation6], 1
    %200 = vsyncpa [#allocation9], 1
    %201 = vsyncpa [#allocation4], 1

</llo_original>
